<compile_context>
chip_gen: v6e
topology: v6e:2x2x1
jax: 0.10.0
libtpu: 0.0.40
codegen_flags: <defaults>
</compile_context>

<pallas_src>
import functools

import numpy as np
import jax
import jax.numpy as jnp
from jax.experimental import pallas as pl
from jax.experimental.pallas import tpu as pltpu

EPS = 1e-5  # PyTorch InstanceNorm2d default (affine=False, biased variance)

# 3x3 tap offsets, row-major; tap index 4 is the center.
_TAPS = tuple((dy, dx) for dy in (-1, 0, 1) for dx in (-1, 0, 1))


def _instance_norm_relu(y, inv_n):
    # y: (C, HW) float32. Two-pass stats (mean, then centered sum of squares):
    # matches PyTorch numerics, var >= 0 by construction.
    mean = jnp.sum(y, axis=1, keepdims=True) * inv_n
    c = y - mean
    var = jnp.sum(c * c, axis=1, keepdims=True) * inv_n
    return jnp.maximum(c * jax.lax.rsqrt(var + EPS), 0.0)


def _conv3x3(x, w, mask_rows, shifts, c_in, accumulate):
    """3x3 / pad=1 conv of x:(C, HW) with w:(Cout, 9*C) tap-major.

    Shifted taps are lane rolls (XLU); zero padding is realized with the
    precomputed border masks (every wrapped-around position is a masked
    position, so roll+mask is exact).  No bias: it is cancelled by the
    following affine=False InstanceNorm.
    """
    if accumulate:
        # Large-C path: 9 accumulating matmuls, no (9C, HW) concat slab.
        acc = None
        for t, sh in enumerate(shifts):
            rolled = x if sh == 0 else pltpu.roll(x, sh, axis=1)
            m = mask_rows[t]
            tap = rolled if m is None else rolled * m
            part = jnp.dot(w[:, t * c_in:(t + 1) * c_in], tap,
                           preferred_element_type=jnp.float32)
            acc = part if acc is None else acc + part
        return acc
    # Small-C path: one K = 9*C contraction on the MXU.
    pieces = []
    for t, sh in enumerate(shifts):
        rolled = x if sh == 0 else pltpu.roll(x, sh, axis=1)
        m = mask_rows[t]
        pieces.append(rolled if m is None else rolled * m)
    patches = jnp.concatenate(pieces, axis=0)              # (9*C, HW)
    return jnp.dot(w, patches, preferred_element_type=jnp.float32)


def _convblock_kernel(x_ref, w1_ref, w2_ref, masks_ref, out_ref, *,
                      H, W, accum1, accum2):
    # x_ref:     (BB, Cin, H*W)   HBM dtype (f32); cast in-kernel
    # w1_ref:    (Cout, 9*Cin)    compute dtype
    # w2_ref:    (Cout, 9*Cout)   compute dtype
    # masks_ref: (8, H*W)         compute dtype (border-validity, center excluded)
    # out_ref:   (BB, Cout, H*W)  out dtype
    BB, Cin, HW = x_ref.shape
    Cout = out_ref.shape[1]
    cdt = w1_ref.dtype
    inv_n = jnp.float32(1.0 / HW)

    w1 = w1_ref[...]
    w2 = w2_ref[...]
    masks = masks_ref[...]                                  # (8, HW)

    # Static roll shifts + per-tap mask views (hoisted out of the batch loop).
    shifts, mask_rows = [], []
    for t, (dy, dx) in enumerate(_TAPS):
        src_off = dy * W + dx                               # flat source offset
        shifts.append((-src_off) % HW)                      # pltpu.roll shift
        if dy == 0 and dx == 0:
            mask_rows.append(None)                          # center: always valid
        else:
            r = t if t < 4 else t - 1                       # skip center row
            mask_rows.append(masks[r:r + 1, :])             # (1, HW)

    def body(b, carry):
        x = x_ref[b].astype(cdt)                            # (Cin, HW)
        y1 = _instance_norm_relu(
            _conv3x3(x, w1, mask_rows, shifts, Cin, accum1), inv_n)
        y2 = _instance_norm_relu(
            _conv3x3(y1.astype(cdt), w2, mask_rows, shifts, Cout, accum2), inv_n)
        out_ref[b] = y2.astype(out_ref.dtype)
        return carry

    if BB == 1:
        body(0, 0)
    else:
        # fori_loop bounds live ranges (a Python loop keeps several images'
        # patches/intermediates live simultaneously); unroll=True keeps LLO
        # scheduling visibility for small static BB.
        jax.lax.fori_loop(0, BB, body, 0, unroll=True)


def _border_masks(H, W):
    """(8, H*W) 0/1 validity masks for the 8 non-center taps of a 3x3/pad=1 conv."""
    pos = np.arange(H * W)
    py, px = pos // W, pos % W
    rows = []
    for dy, dx in _TAPS:
        if dy == 0 and dx == 0:
            continue
        rows.append((py + dy >= 0) & (py + dy < H) & (px + dx >= 0) & (px + dx < W))
    return np.stack(rows, 0)


def convblock(x_nchw, w1, b1=None, w2=None, b2=None, *,
              compute_dtype=jnp.float32, out_dtype=jnp.float32,
              batch_block=1, accum_channel_threshold=64):
    """x_nchw: (N, Cin, H, W); w: (Cout, Cin/Cout, 3, 3) PyTorch layout; b: (Cout,).

    b1/b2 are accepted only for API parity with the PyTorch module; a per-channel
    conv bias is exactly cancelled by the following affine=False InstanceNorm,
    so they are not used (zero accuracy impact).
    compute_dtype=jnp.bfloat16 is recommended on v6e/v7x (MXU operands only;
    accumulation, InstanceNorm and ReLU stay f32).
    """
    del b1, b2
    N, Cin, H, W = x_nchw.shape
    Cout = w1.shape[0]
    HW = H * W
    BB = batch_block
    assert N % BB == 0, "batch_block must divide N"
    # Keep >= 2 grid steps where possible so v7x's 2 TensorCores both get work.

    # Zero-copy layout change: NCHW -> (N, C, H*W); spatial on the lane axis.
    # No wrapper astype: x stays in its HBM dtype and is cast inside the kernel.
    x = x_nchw.reshape(N, Cin, HW)

    # (Cout, C, kh, kw) -> (Cout, kh, kw, C) -> (Cout, 9*C): tap-major K,
    # matching the patch build / w-slice order in the kernel.
    w1f = jnp.transpose(w1, (0, 2, 3, 1)).reshape(Cout, 9 * Cin).astype(compute_dtype)
    w2f = jnp.transpose(w2, (0, 2, 3, 1)).reshape(Cout, 9 * Cout).astype(compute_dtype)

    # Border masks built once on host; resident input (constant index_map).
    # NOTE: roll+mask is exact only while the lane axis is one image's H*W
    # flattening; folding batch into the lane axis requires tiling these masks.
    masks = jnp.asarray(_border_masks(H, W), dtype=compute_dtype)       # (8, HW)

    accum1 = Cin >= accum_channel_threshold
    accum2 = Cout >= accum_channel_threshold

    # Explicit scoped-VMEM budget: double-buffered x/out blocks + weight/mask
    # slabs + patch slab (concat path only) + f32 intermediates, 2x headroom,
    # clamped to [32 MiB, 64 MiB] (v7x physical VMEM per core is 64 MiB).
    cbytes = jnp.dtype(compute_dtype).itemsize
    est = (2 * BB * Cin * HW * jnp.dtype(x.dtype).itemsize
           + 2 * BB * Cout * HW * jnp.dtype(out_dtype).itemsize
           + 2 * 9 * Cout * (Cin + Cout) * cbytes
           + 2 * 8 * HW * cbytes
           + (0 if (accum1 and accum2) else 9 * max(Cin, Cout) * HW * cbytes)
           + 6 * Cout * HW * 4)
    vmem_limit = int(min(max(2 * est, 32 << 20), 64 << 20))

    kernel = functools.partial(_convblock_kernel, H=H, W=W,
                               accum1=accum1, accum2=accum2)

    out = pl.pallas_call(
        kernel,
        out_shape=jax.ShapeDtypeStruct((N, Cout, HW), out_dtype),
        grid_spec=pltpu.PrefetchScalarGridSpec(
            num_scalar_prefetch=0,
            grid=(N // BB,),
            in_specs=[
                pl.BlockSpec((BB, Cin, HW), lambda n: (n, 0, 0)),
                pl.BlockSpec((Cout, 9 * Cin), lambda n: (0, 0)),
                pl.BlockSpec((Cout, 9 * Cout), lambda n: (0, 0)),
                pl.BlockSpec((8, HW), lambda n: (0, 0)),
            ],
            out_specs=pl.BlockSpec((BB, Cout, HW), lambda n: (n, 0, 0)),
        ),
        compiler_params=pltpu.CompilerParams(
            dimension_semantics=("parallel",),
            vmem_limit_bytes=vmem_limit),
    )(x, w1f, w2f, masks)

    # (N, Cout, H*W) -> (N, Cout, H, W): pure reshape, already NCHW.
    return out.reshape(N, Cout, H, W)


def ref_convblock(x, w1, b1, w2, b2):
    # pure-JAX reference (NCHW), mirrors the PyTorch module exactly (with biases)
    def conv(x, w, b):
        y = jax.lax.conv_general_dilated(
            x, w, window_strides=(1, 1), padding=((1, 1), (1, 1)),
            dimension_numbers=("NCHW", "OIHW", "NCHW"))
        return y + b[None, :, None, None]

    def inrelu(x):
        m = jnp.mean(x, axis=(2, 3), keepdims=True)
        v = jnp.mean((x - m) ** 2, axis=(2, 3), keepdims=True)
        return jnp.maximum((x - m) * jax.lax.rsqrt(v + EPS), 0.0)

    return inrelu(conv(inrelu(conv(x, w1, b1)), w2, b2))


if __name__ == "__main__":
    N, Cin, Cout, H, W = 2, 4, 8, 16, 16

    key = jax.random.PRNGKey(0)
    kx, kw1, kb1, kw2, kb2 = jax.random.split(key, 5)

    x = jax.random.normal(kx, (N, Cin, H, W), jnp.float32)

    # deterministic init, PyTorch-default-like uniform(-1/sqrt(fan_in), +)
    bound1 = 1.0 / (Cin * 9) ** 0.5
    bound2 = 1.0 / (Cout * 9) ** 0.5
    w1 = jax.random.uniform(kw1, (Cout, Cin, 3, 3), jnp.float32, -bound1, bound1)
    b1 = jax.random.uniform(kb1, (Cout,), jnp.float32, -bound1, bound1)
    w2 = jax.random.uniform(kw2, (Cout, Cout, 3, 3), jnp.float32, -bound2, bound2)
    b2 = jax.random.uniform(kb2, (Cout,), jnp.float32, -bound2, bound2)

    ref = jax.block_until_ready(ref_convblock(x, w1, b1, w2, b2))

    # f32, small-C single-contraction path (bias dropped -> exact cancellation).
    out = jax.block_until_ready(convblock(x, w1, b1, w2, b2))
    assert out.shape == (N, Cout, H, W), out.shape
    err = float(jnp.max(jnp.abs(out - ref)))
    assert err < 1e-3, f"f32 path max abs error {err}"

    # Accumulating-matmul path (forced; the default for large channel counts).
    out_acc = jax.block_until_ready(
        convblock(x, w1, b1, w2, b2, accum_channel_threshold=1))
    err_acc = float(jnp.max(jnp.abs(out_acc - ref)))
    assert err_acc < 1e-3, f"accum path max abs error {err_acc}"

    # batch_block > 1 path (fori_loop over images within one grid step).
    out_bb = jax.block_until_ready(convblock(x, w1, b1, w2, b2, batch_block=2))
    err_bb = float(jnp.max(jnp.abs(out_bb - ref)))
    assert err_bb < 1e-3, f"batch_block path max abs error {err_bb}"

    # bf16-operand path (f32 accumulation / InstanceNorm): v6e/v7x MXU fast path.
    out_bf = jax.block_until_ready(
        convblock(x, w1, b1, w2, b2, compute_dtype=jnp.bfloat16))
    err_bf = float(jnp.max(jnp.abs(out_bf - ref)))
    assert err_bf < 1e-1, f"bf16 path max abs error {err_bf}"

    print("KERNEL_OK")
</pallas_src>

<mosaic_0001>
module attributes {stable_mosaic.version = 11 : i64} {
  func.func @_convblock_kernel(%arg0: i32, %arg1: memref<1x4x256xf32, #tpu.memory_space<vmem>>, %arg2: memref<8x36xf32, #tpu.memory_space<vmem>>, %arg3: memref<8x72xf32, #tpu.memory_space<vmem>>, %arg4: memref<8x256xf32, #tpu.memory_space<vmem>>, %arg5: memref<1x8x256xf32, #tpu.memory_space<vmem>>) attributes {dimension_semantics = [#tpu.dimension_semantics<parallel>], iteration_bounds = array<i64: 2>, scalar_prefetch = 0 : i64, scratch_operands = 0 : i64, tpu.core_type = #tpu.core_type<tc>, window_params = [{transform_indices = @transform_0, window_bounds = array<i64: 1, 4, 256>}, {pipeline_mode = #tpu.pipeline_mode<synchronous>, transform_indices = @transform_1, window_bounds = array<i64: 8, 36>}, {pipeline_mode = #tpu.pipeline_mode<synchronous>, transform_indices = @transform_2, window_bounds = array<i64: 8, 72>}, {pipeline_mode = #tpu.pipeline_mode<synchronous>, transform_indices = @transform_3, window_bounds = array<i64: 8, 256>}, {transform_indices = @transform_4, window_bounds = array<i64: 1, 8, 256>}]} {
    %c0 = arith.constant 0 : index
    %c0_0 = arith.constant 0 : index
    %0 = vector.load %arg2[%c0, %c0_0] : memref<8x36xf32, #tpu.memory_space<vmem>>, vector<8x36xf32>
    %c0_1 = arith.constant 0 : index
    %c0_2 = arith.constant 0 : index
    %1 = vector.load %arg3[%c0_1, %c0_2] : memref<8x72xf32, #tpu.memory_space<vmem>>, vector<8x72xf32>
    %c0_3 = arith.constant 0 : index
    %c0_4 = arith.constant 0 : index
    %2 = vector.load %arg4[%c0_3, %c0_4] : memref<8x256xf32, #tpu.memory_space<vmem>>, vector<8x256xf32>
    %3 = vector.extract_strided_slice %2 {offsets = [0, 0], sizes = [1, 256], strides = [1, 1]} : vector<8x256xf32> to vector<1x256xf32>
    %4 = vector.extract_strided_slice %2 {offsets = [1, 0], sizes = [1, 256], strides = [1, 1]} : vector<8x256xf32> to vector<1x256xf32>
    %5 = vector.extract_strided_slice %2 {offsets = [2, 0], sizes = [1, 256], strides = [1, 1]} : vector<8x256xf32> to vector<1x256xf32>
    %6 = vector.extract_strided_slice %2 {offsets = [3, 0], sizes = [1, 256], strides = [1, 1]} : vector<8x256xf32> to vector<1x256xf32>
    %7 = vector.extract_strided_slice %2 {offsets = [4, 0], sizes = [1, 256], strides = [1, 1]} : vector<8x256xf32> to vector<1x256xf32>
    %8 = vector.extract_strided_slice %2 {offsets = [5, 0], sizes = [1, 256], strides = [1, 1]} : vector<8x256xf32> to vector<1x256xf32>
    %9 = vector.extract_strided_slice %2 {offsets = [6, 0], sizes = [1, 256], strides = [1, 1]} : vector<8x256xf32> to vector<1x256xf32>
    %10 = vector.extract_strided_slice %2 {offsets = [7, 0], sizes = [1, 256], strides = [1, 1]} : vector<8x256xf32> to vector<1x256xf32>
    %c0_5 = arith.constant 0 : index
    %c0_6 = arith.constant 0 : index
    %c0_7 = arith.constant 0 : index
    %11 = vector.load %arg1[%c0_5, %c0_6, %c0_7] : memref<1x4x256xf32, #tpu.memory_space<vmem>>, vector<1x4x256xf32>
    %12 = vector.shape_cast %11 : vector<1x4x256xf32> to vector<4x256xf32>
    %c17_i32 = arith.constant 17 : i32
    %13 = tpu.dynamic_rotate %12 by %c17_i32 dim 1 : vector<4x256xf32>, i32 -> vector<4x256xf32>
    %14 = vector.broadcast %3 : vector<1x256xf32> to vector<4x256xf32>
    %15 = arith.mulf %13, %14 : vector<4x256xf32>
    %c16_i32 = arith.constant 16 : i32
    %16 = tpu.dynamic_rotate %12 by %c16_i32 dim 1 : vector<4x256xf32>, i32 -> vector<4x256xf32>
    %17 = vector.broadcast %4 : vector<1x256xf32> to vector<4x256xf32>
    %18 = arith.mulf %16, %17 : vector<4x256xf32>
    %c15_i32 = arith.constant 15 : i32
    %19 = tpu.dynamic_rotate %12 by %c15_i32 dim 1 : vector<4x256xf32>, i32 -> vector<4x256xf32>
    %20 = vector.broadcast %5 : vector<1x256xf32> to vector<4x256xf32>
    %21 = arith.mulf %19, %20 : vector<4x256xf32>
    %c1_i32 = arith.constant 1 : i32
    %22 = tpu.dynamic_rotate %12 by %c1_i32 dim 1 : vector<4x256xf32>, i32 -> vector<4x256xf32>
    %23 = vector.broadcast %6 : vector<1x256xf32> to vector<4x256xf32>
    %24 = arith.mulf %22, %23 : vector<4x256xf32>
    %c255_i32 = arith.constant 255 : i32
    %25 = tpu.dynamic_rotate %12 by %c255_i32 dim 1 : vector<4x256xf32>, i32 -> vector<4x256xf32>
    %26 = vector.broadcast %7 : vector<1x256xf32> to vector<4x256xf32>
    %27 = arith.mulf %25, %26 : vector<4x256xf32>
    %c241_i32 = arith.constant 241 : i32
    %28 = tpu.dynamic_rotate %12 by %c241_i32 dim 1 : vector<4x256xf32>, i32 -> vector<4x256xf32>
    %29 = vector.broadcast %8 : vector<1x256xf32> to vector<4x256xf32>
    %30 = arith.mulf %28, %29 : vector<4x256xf32>
    %c240_i32 = arith.constant 240 : i32
    %31 = tpu.dynamic_rotate %12 by %c240_i32 dim 1 : vector<4x256xf32>, i32 -> vector<4x256xf32>
    %32 = vector.broadcast %9 : vector<1x256xf32> to vector<4x256xf32>
    %33 = arith.mulf %31, %32 : vector<4x256xf32>
    %c239_i32 = arith.constant 239 : i32
    %34 = tpu.dynamic_rotate %12 by %c239_i32 dim 1 : vector<4x256xf32>, i32 -> vector<4x256xf32>
    %35 = vector.broadcast %10 : vector<1x256xf32> to vector<4x256xf32>
    %36 = arith.mulf %34, %35 : vector<4x256xf32>
    %37 = tpu.concatenate %15, %18, %21, %24, %12, %27, %30, %33, %36 in 0 : vector<4x256xf32>, vector<4x256xf32>, vector<4x256xf32>, vector<4x256xf32>, vector<4x256xf32>, vector<4x256xf32>, vector<4x256xf32>, vector<4x256xf32>, vector<4x256xf32> -> vector<36x256xf32>
    %cst = arith.constant dense<0.000000e+00> : vector<8x256xf32>
    %38 = tpu.matmul %0, %37, %cst {dimension_numbers = #tpu.dot_dimension_numbers<[1], [0], [0], [1], [0, 0, 1, 1], [], []>} : vector<8x36xf32>, vector<36x256xf32>, vector<8x256xf32> -> vector<8x256xf32>
    %cst_8 = arith.constant dense<0.000000e+00> : vector<8xf32>
    %39 = vector.multi_reduction <add>, %38, %cst_8 [1] : vector<8x256xf32> to vector<8xf32>
    %40 = vector.shape_cast %39 : vector<8xf32> to vector<8x1xf32>
    %cst_9 = arith.constant 3.906250e-03 : f32
    %41 = vector.broadcast %cst_9 : f32 to vector<8x1xf32>
    %42 = arith.mulf %40, %41 : vector<8x1xf32>
    %43 = vector.broadcast %42 : vector<8x1xf32> to vector<8x256xf32>
    %44 = arith.subf %38, %43 : vector<8x256xf32>
    %45 = arith.mulf %44, %44 : vector<8x256xf32>
    %cst_10 = arith.constant dense<0.000000e+00> : vector<8xf32>
    %46 = vector.multi_reduction <add>, %45, %cst_10 [1] : vector<8x256xf32> to vector<8xf32>
    %47 = vector.shape_cast %46 : vector<8xf32> to vector<8x1xf32>
    %cst_11 = arith.constant 3.906250e-03 : f32
    %48 = vector.broadcast %cst_11 : f32 to vector<8x1xf32>
    %49 = arith.mulf %47, %48 : vector<8x1xf32>
    %cst_12 = arith.constant 9.99999974E-6 : f32
    %50 = vector.broadcast %cst_12 : f32 to vector<8x1xf32>
    %51 = arith.addf %49, %50 : vector<8x1xf32>
    %52 = math.rsqrt %51 : vector<8x1xf32>
    %53 = vector.broadcast %52 : vector<8x1xf32> to vector<8x256xf32>
    %54 = arith.mulf %44, %53 : vector<8x256xf32>
    %cst_13 = arith.constant 0.000000e+00 : f32
    %55 = vector.broadcast %cst_13 : f32 to vector<8x256xf32>
    %56 = arith.maximumf %54, %55 : vector<8x256xf32>
    %c17_i32_14 = arith.constant 17 : i32
    %57 = tpu.dynamic_rotate %56 by %c17_i32_14 dim 1 : vector<8x256xf32>, i32 -> vector<8x256xf32>
    %58 = vector.broadcast %3 : vector<1x256xf32> to vector<8x256xf32>
    %59 = arith.mulf %57, %58 : vector<8x256xf32>
    %c16_i32_15 = arith.constant 16 : i32
    %60 = tpu.dynamic_rotate %56 by %c16_i32_15 dim 1 : vector<8x256xf32>, i32 -> vector<8x256xf32>
    %61 = vector.broadcast %4 : vector<1x256xf32> to vector<8x256xf32>
    %62 = arith.mulf %60, %61 : vector<8x256xf32>
    %c15_i32_16 = arith.constant 15 : i32
    %63 = tpu.dynamic_rotate %56 by %c15_i32_16 dim 1 : vector<8x256xf32>, i32 -> vector<8x256xf32>
    %64 = vector.broadcast %5 : vector<1x256xf32> to vector<8x256xf32>
    %65 = arith.mulf %63, %64 : vector<8x256xf32>
    %c1_i32_17 = arith.constant 1 : i32
    %66 = tpu.dynamic_rotate %56 by %c1_i32_17 dim 1 : vector<8x256xf32>, i32 -> vector<8x256xf32>
    %67 = vector.broadcast %6 : vector<1x256xf32> to vector<8x256xf32>
    %68 = arith.mulf %66, %67 : vector<8x256xf32>
    %c255_i32_18 = arith.constant 255 : i32
    %69 = tpu.dynamic_rotate %56 by %c255_i32_18 dim 1 : vector<8x256xf32>, i32 -> vector<8x256xf32>
    %70 = vector.broadcast %7 : vector<1x256xf32> to vector<8x256xf32>
    %71 = arith.mulf %69, %70 : vector<8x256xf32>
    %c241_i32_19 = arith.constant 241 : i32
    %72 = tpu.dynamic_rotate %56 by %c241_i32_19 dim 1 : vector<8x256xf32>, i32 -> vector<8x256xf32>
    %73 = vector.broadcast %8 : vector<1x256xf32> to vector<8x256xf32>
    %74 = arith.mulf %72, %73 : vector<8x256xf32>
    %c240_i32_20 = arith.constant 240 : i32
    %75 = tpu.dynamic_rotate %56 by %c240_i32_20 dim 1 : vector<8x256xf32>, i32 -> vector<8x256xf32>
    %76 = vector.broadcast %9 : vector<1x256xf32> to vector<8x256xf32>
    %77 = arith.mulf %75, %76 : vector<8x256xf32>
    %c239_i32_21 = arith.constant 239 : i32
    %78 = tpu.dynamic_rotate %56 by %c239_i32_21 dim 1 : vector<8x256xf32>, i32 -> vector<8x256xf32>
    %79 = vector.broadcast %10 : vector<1x256xf32> to vector<8x256xf32>
    %80 = arith.mulf %78, %79 : vector<8x256xf32>
    %81 = tpu.concatenate %59, %62, %65, %68, %56, %71, %74, %77, %80 in 0 : vector<8x256xf32>, vector<8x256xf32>, vector<8x256xf32>, vector<8x256xf32>, vector<8x256xf32>, vector<8x256xf32>, vector<8x256xf32>, vector<8x256xf32>, vector<8x256xf32> -> vector<72x256xf32>
    %cst_22 = arith.constant dense<0.000000e+00> : vector<8x256xf32>
    %82 = tpu.matmul %1, %81, %cst_22 {dimension_numbers = #tpu.dot_dimension_numbers<[1], [0], [0], [1], [0, 0, 1, 1], [], []>} : vector<8x72xf32>, vector<72x256xf32>, vector<8x256xf32> -> vector<8x256xf32>
    %cst_23 = arith.constant dense<0.000000e+00> : vector<8xf32>
    %83 = vector.multi_reduction <add>, %82, %cst_23 [1] : vector<8x256xf32> to vector<8xf32>
    %84 = vector.shape_cast %83 : vector<8xf32> to vector<8x1xf32>
    %cst_24 = arith.constant 3.906250e-03 : f32
    %85 = vector.broadcast %cst_24 : f32 to vector<8x1xf32>
    %86 = arith.mulf %84, %85 : vector<8x1xf32>
    %87 = vector.broadcast %86 : vector<8x1xf32> to vector<8x256xf32>
    %88 = arith.subf %82, %87 : vector<8x256xf32>
    %89 = arith.mulf %88, %88 : vector<8x256xf32>
    %cst_25 = arith.constant dense<0.000000e+00> : vector<8xf32>
    %90 = vector.multi_reduction <add>, %89, %cst_25 [1] : vector<8x256xf32> to vector<8xf32>
    %91 = vector.shape_cast %90 : vector<8xf32> to vector<8x1xf32>
    %cst_26 = arith.constant 3.906250e-03 : f32
    %92 = vector.broadcast %cst_26 : f32 to vector<8x1xf32>
    %93 = arith.mulf %91, %92 : vector<8x1xf32>
    %cst_27 = arith.constant 9.99999974E-6 : f32
    %94 = vector.broadcast %cst_27 : f32 to vector<8x1xf32>
    %95 = arith.addf %93, %94 : vector<8x1xf32>
    %96 = math.rsqrt %95 : vector<8x1xf32>
    %97 = vector.broadcast %96 : vector<8x1xf32> to vector<8x256xf32>
    %98 = arith.mulf %88, %97 : vector<8x256xf32>
    %cst_28 = arith.constant 0.000000e+00 : f32
    %99 = vector.broadcast %cst_28 : f32 to vector<8x256xf32>
    %100 = arith.maximumf %98, %99 : vector<8x256xf32>
    %c0_29 = arith.constant 0 : index
    %c0_30 = arith.constant 0 : index
    %c0_31 = arith.constant 0 : index
    %101 = vector.load %arg5[%c0_29, %c0_30, %c0_31] : memref<1x8x256xf32, #tpu.memory_space<vmem>>, vector<1x8x256xf32>
    %102 = vector.shape_cast %101 : vector<1x8x256xf32> to vector<8x256xf32>
    %103 = vector.shape_cast %100 : vector<8x256xf32> to vector<1x8x256xf32>
    tpu.vector_store %arg5[%c0_29, %c0_30, %c0_31], %103 {strides = array<i32>} : memref<1x8x256xf32, #tpu.memory_space<vmem>>, vector<1x8x256xf32>,
    return
  }
  func.func @transform_0(%arg0: i32) -> (i32, i32, i32) {
    %c0_i32 = arith.constant 0 : i32
    %c0_i32_0 = arith.constant 0 : i32
    %c0_i32_1 = arith.constant 0 : i32
    return %arg0, %c0_i32, %c0_i32_0 : i32, i32, i32
  }
  func.func @transform_1(%arg0: i32) -> (i32, i32) {
    %c0_i32 = arith.constant 0 : i32
    %c0_i32_0 = arith.constant 0 : i32
    %c0_i32_1 = arith.constant 0 : i32
    return %c0_i32, %c0_i32_0 : i32, i32
  }
  func.func @transform_2(%arg0: i32) -> (i32, i32) {
    %c0_i32 = arith.constant 0 : i32
    %c0_i32_0 = arith.constant 0 : i32
    %c0_i32_1 = arith.constant 0 : i32
    return %c0_i32, %c0_i32_0 : i32, i32
  }
  func.func @transform_3(%arg0: i32) -> (i32, i32) {
    %c0_i32 = arith.constant 0 : i32
    %c0_i32_0 = arith.constant 0 : i32
    %c0_i32_1 = arith.constant 0 : i32
    return %c0_i32, %c0_i32_0 : i32, i32
  }
  func.func @transform_4(%arg0: i32) -> (i32, i32, i32) {
    %c0_i32 = arith.constant 0 : i32
    %c0_i32_0 = arith.constant 0 : i32
    %c0_i32_1 = arith.constant 0 : i32
    return %arg0, %c0_i32, %c0_i32_0 : i32, i32, i32
  }
}

</mosaic_0001>

<llo_original>
// kernel: tpu_custom_call.1
$region0: #{tpu_custom_call.1}
  #allocation0 [shape = 'u32[]', space=smem, size = 0x4, offset = 0x4, fixed_abs, tag = 'smem constant byte address 0x4 - core index']
  #allocation1 [shape = 'u32[144,128]{1,0:T(1,128)}', space=vmem, size = 0x12000, scoped, tag = 'internal scratch']
  %s0 = inlined_call_operand.hbm [shape: f32[2,4,256], index: 0, kind: input, shape index: {}]
  %s1 = inlined_call_operand.hbm [shape: f32[8,36], index: 1, kind: input, shape index: {}]
  %s2 = inlined_call_operand.hbm [shape: f32[8,72], index: 2, kind: input, shape index: {}]
  %s3 = inlined_call_operand.hbm [shape: f32[8,256], index: 3, kind: input, shape index: {}]
  %s4 = inlined_call_operand.hbm [shape: f32[2,8,256], index: 4, kind: output, shape index: {}]
  %s5 = sld [smem:[#allocation0]]
  $region65: #{tpu_custom_call.1} parent=0
    _
  %s7 = ssub.s32 1, %s5
  %s8 = scalar_select 0, %s7, %s5
  $region1: #{tpu_custom_call.1} parent=0
    #allocation2 [shape = 'u8[8192]{0}', space=vmem, size = 0x2000, scoped, tag = 'input window, operand 0']
    #allocation3 [shape = 's32[2]{0}', space=sflag, size = 0x8, scoped, tag = 'scoped memory for tpu_custom_call.1']
    #allocation4 [shape = 's32[2]{0}', space=sflag, size = 0x8, scoped, tag = 'scoped memory for tpu_custom_call.1']
    #allocation5 [shape = 'u8[4096]{0}', space=vmem, size = 0x1000, scoped, tag = 'input window, operand 1, single buffered']
    #allocation6 [shape = 's32[1]{0}', space=sflag, size = 0x4, scoped, tag = 'scoped memory for tpu_custom_call.1']
    #allocation7 [shape = 'u8[4096]{0}', space=vmem, size = 0x1000, scoped, tag = 'input window, operand 2, single buffered']
    #allocation8 [shape = 'u8[8192]{0}', space=vmem, size = 0x2000, scoped, tag = 'input window, operand 3, single buffered']
    #allocation9 [shape = 's32[1]{0}', space=sflag, size = 0x4, scoped, tag = 'scoped memory for tpu_custom_call.1']
    #allocation10 [shape = 'u8[16384]{0}', space=vmem, size = 0x4000, scoped, tag = 'output window, operand 0']
    %9 = vsyncpa [#allocation3], 0
    %s10 = scalar_lea.sflag [#allocation3], 1
    %11 = vsyncpa %s10, 0
    %12 = vsyncpa [#allocation6], 0
    %13 = vsyncpa [#allocation9], 0
    %14 = vsyncpa [#allocation4], 0
    %s15 = scalar_lea.sflag [#allocation4], 1
    %16 = vsyncpa %s15, 0
    loop: start=0, step=1, limit=4
    $region2: #{tpu_custom_call.1} parent=1 // loop_pre_header
      _
    $region3: #{tpu_custom_call.1} parent=1 // loop_header
      %s18 = sphi 0, %s22
      %p19 = scmp.ge.s32.totalorder %s18, 4
      %s28 = sphi 0, %s30
      %s31 = sphi 0, %s28
      %s32 = sphi 0, %s31
      %s48 = sphi 0, %s32
      %s52 = sphi 0, %s52
      %s54 = sphi 0, %s52
      %s55 = sphi 0, %s54
      %s69 = sphi 0, %s55
      %s73 = sphi 0, %s73
      %s75 = sphi 0, %s73
      %s76 = sphi 0, %s75
      %s90 = sphi 0, %s76
      %s94 = sphi 0, %s94
      %s96 = sphi 0, %s94
      %s97 = sphi 0, %s96
      %s111 = sphi 0, %s97
      %s117 = sphi 0, %s119
      %s120 = sphi 0, %s117
      %s121 = sphi 0, %s120
      %s137 = sphi 0, %s121
    $region4: #{tpu_custom_call.1} parent=1 // loop_header_branch
      %21 = sbr.rel (%p19) target = $region8
    $region5: #{tpu_custom_call.1} parent=1 // loop_body
      %s23 = ssub.s32 %s18, 1
      %s24 = ssub.s32 %s18, 2
      %s25 = sadd.s32 %s18, 1
      %s26 = ssub.s32 %s18, %s25
      %p27 = scmp.eq.s32.totalorder %s26, 0
      %s29 = sadd.s32 %s28, 1
      %s30 = scalar_select %p27, %s28, %s29
      %p33 = pneg %p27
      %p34 = scmp.eq.s32.totalorder %s18, 1
      %p35 = por %p33, %p34
      %p36 = scmp.ne.s32.totalorder %s28, %s31
      %p37 = scmp.eq.s32.totalorder %s18, 0
      %p38 = por %p36, %p37
      %p39 = scmp.ne.s32.totalorder %s28, %s31
      %p40 = scmp.eq.s32.totalorder %s23, 1
      %p41 = por %p39, %p40
      %p42 = scmp.ne.s32.totalorder %s31, %s32
      %p43 = scmp.eq.s32.totalorder %s23, 0
      %p44 = por %p42, %p43
      %p45 = scmp.ne.s32.totalorder %s31, %s32
      %p46 = scmp.eq.s32.totalorder %s24, 1
      %p47 = por %p45, %p46
      %p49 = scmp.ne.s32.totalorder %s32, %s48
      %p50 = scmp.eq.s32.totalorder %s24, 0
      %p51 = por %p49, %p50
      %s53 = sadd.s32 %s52, 1
      %p56 = scmp.eq.s32.totalorder %s18, 1
      %p57 = scmp.ne.s32.totalorder %s52, %s54
      %p58 = scmp.eq.s32.totalorder %s18, 0
      %p59 = por %p57, %p58
      %p60 = scmp.ne.s32.totalorder %s52, %s54
      %p61 = scmp.eq.s32.totalorder %s23, 1
      %p62 = por %p60, %p61
      %p63 = scmp.ne.s32.totalorder %s54, %s55
      %p64 = scmp.eq.s32.totalorder %s23, 0
      %p65 = por %p63, %p64
      %p66 = scmp.ne.s32.totalorder %s54, %s55
      %p67 = scmp.eq.s32.totalorder %s24, 1
      %p68 = por %p66, %p67
      %p70 = scmp.ne.s32.totalorder %s55, %s69
      %p71 = scmp.eq.s32.totalorder %s24, 0
      %p72 = por %p70, %p71
      %s74 = sadd.s32 %s73, 1
      %p77 = scmp.eq.s32.totalorder %s18, 1
      %p78 = scmp.ne.s32.totalorder %s73, %s75
      %p79 = scmp.eq.s32.totalorder %s18, 0
      %p80 = por %p78, %p79
      %p81 = scmp.ne.s32.totalorder %s73, %s75
      %p82 = scmp.eq.s32.totalorder %s23, 1
      %p83 = por %p81, %p82
      %p84 = scmp.ne.s32.totalorder %s75, %s76
      %p85 = scmp.eq.s32.totalorder %s23, 0
      %p86 = por %p84, %p85
      %p87 = scmp.ne.s32.totalorder %s75, %s76
      %p88 = scmp.eq.s32.totalorder %s24, 1
      %p89 = por %p87, %p88
      %p91 = scmp.ne.s32.totalorder %s76, %s90
      %p92 = scmp.eq.s32.totalorder %s24, 0
      %p93 = por %p91, %p92
      %s95 = sadd.s32 %s94, 1
      %p98 = scmp.eq.s32.totalorder %s18, 1
      %p99 = scmp.ne.s32.totalorder %s94, %s96
      %p100 = scmp.eq.s32.totalorder %s18, 0
      %p101 = por %p99, %p100
      %p102 = scmp.ne.s32.totalorder %s94, %s96
      %p103 = scmp.eq.s32.totalorder %s23, 1
      %p104 = por %p102, %p103
      %p105 = scmp.ne.s32.totalorder %s96, %s97
      %p106 = scmp.eq.s32.totalorder %s23, 0
      %p107 = por %p105, %p106
      %p108 = scmp.ne.s32.totalorder %s96, %s97
      %p109 = scmp.eq.s32.totalorder %s24, 1
      %p110 = por %p108, %p109
      %p112 = scmp.ne.s32.totalorder %s97, %s111
      %p113 = scmp.eq.s32.totalorder %s24, 0
      %p114 = por %p112, %p113
      %s115 = ssub.s32 %s18, %s25
      %p116 = scmp.eq.s32.totalorder %s115, 0
      %s118 = sadd.s32 %s117, 1
      %s119 = scalar_select %p116, %s117, %s118
      %p122 = pneg %p116
      %p123 = scmp.eq.s32.totalorder %s18, 1
      %p124 = por %p122, %p123
      %p125 = scmp.ne.s32.totalorder %s117, %s120
      %p126 = scmp.eq.s32.totalorder %s18, 0
      %p127 = por %p125, %p126
      %p128 = scmp.ne.s32.totalorder %s117, %s120
      %p129 = scmp.eq.s32.totalorder %s23, 1
      %p130 = por %p128, %p129
      %p131 = scmp.ne.s32.totalorder %s120, %s121
      %p132 = scmp.eq.s32.totalorder %s23, 0
      %p133 = por %p131, %p132
      %p134 = scmp.ne.s32.totalorder %s120, %s121
      %p135 = scmp.eq.s32.totalorder %s24, 1
      %p136 = por %p134, %p135
      %p138 = scmp.ne.s32.totalorder %s121, %s137
      %p139 = scmp.eq.s32.totalorder %s24, 0
      %p140 = por %p138, %p139
      %p141 = scmp.le.s32.totalorder 1, %s18
      %p142 = scmp.lt.s32.totalorder %s18, 3
      %p143 = pnand %p141, %p142
      %p144 = pneg %p143
      // Predicated region
      $region9: #{tpu_custom_call.1} parent=5 // pred_check
        _
      $region10: #{tpu_custom_call.1} parent=5 // pred_check_branch
        %146 = sbr.rel (%p143) target = $region12
      $region11: #{tpu_custom_call.1} parent=5 // pred_region
        %s147 = ssub.s32 %s18, 1
        // Predicated region
        $region13: #{tpu_custom_call.1} parent=11 // pred_check
          %p148 = pneg %p65
        $region14: #{tpu_custom_call.1} parent=11 // pred_check_branch
          %150 = sbr.rel (%p148) target = $region16
        $region15: #{tpu_custom_call.1} parent=11 // pred_region
          %s152 = ssub.s32 128, 128
          %153 = vsyncadd [#allocation6], %s152
          %s155 = sshll.u32 [#allocation5], 4
          %s156 = int_to_ptr.vmem [resolvable:$true] %s155
          %158 = dma.hbm_to_vmem [thread:$0]  %s1, 128, %s156, [#allocation6]
        $region16: #{tpu_custom_call.1} parent=11 // pred_fallthru
          _
        // Predicated region
        $region17: #{tpu_custom_call.1} parent=11 // pred_check
          %p159 = pneg %p86
        $region18: #{tpu_custom_call.1} parent=11 // pred_check_branch
          %161 = sbr.rel (%p159) target = $region20
        $region19: #{tpu_custom_call.1} parent=11 // pred_region
          %s163 = ssub.s32 128, 128
          %164 = vsyncadd [#allocation6], %s163
          %s166 = sshll.u32 [#allocation7], 4
          %s167 = int_to_ptr.vmem [resolvable:$true] %s166
          %169 = dma.hbm_to_vmem [thread:$0]  %s2, 128, %s167, [#allocation6]
        $region20: #{tpu_custom_call.1} parent=11 // pred_fallthru
          _
        // Predicated region
        $region21: #{tpu_custom_call.1} parent=11 // pred_check
          %p170 = pneg %p107
        $region22: #{tpu_custom_call.1} parent=11 // pred_check_branch
          %172 = sbr.rel (%p170) target = $region24
        $region23: #{tpu_custom_call.1} parent=11 // pred_region
          %s174 = ssub.s32 256, 256
          %175 = vsyncadd [#allocation9], %s174
          %s177 = sshll.u32 [#allocation8], 4
          %s178 = int_to_ptr.vmem [resolvable:$true] %s177
          %180 = dma.hbm_to_vmem [thread:$0]  %s3, 256, %s178, [#allocation9]
        $region24: #{tpu_custom_call.1} parent=11 // pred_fallthru
          _
      $region12: #{tpu_custom_call.1} parent=5 // pred_fallthru
        _
      %p181 = scmp.lt.s32.totalorder %s18, 2
      // Predicated region
      $region25: #{tpu_custom_call.1} parent=5 // pred_check
        %p182 = pneg %p181
      $region26: #{tpu_custom_call.1} parent=5 // pred_check_branch
        %184 = sbr.rel (%p182) target = $region28
      $region27: #{tpu_custom_call.1} parent=5 // pred_region
        // Predicated region
        $region29: #{tpu_custom_call.1} parent=27 // pred_check
          %p185 = pneg %p38
        $region30: #{tpu_custom_call.1} parent=27 // pred_check_branch
          %187 = sbr.rel (%p185) target = $region32
        $region31: #{tpu_custom_call.1} parent=27 // pred_region
          %s188 = sand.u32 %s28, 1
          %s189 = scalar_lea.sflag [#allocation3], %s188
          %s190 = sand.u32 %s28, 1
          %s191 = smul.addr %s190, 8
          %s192 = scalar_lea.vmem [#allocation2], %s191
          %s194 = ssub.s32 128, 128
          %195 = vsyncadd %s189, %s194
          %s196 = smul.addr %s18, 2
          %s197 = smul.addr %s196, 64
          %s198 = scalar_lea.hbm %s0, %s197
          %s200 = sshll.u32 %s192, 4
          %s201 = int_to_ptr.vmem [resolvable:$true] %s200
          %203 = dma.hbm_to_vmem [thread:$0]  %s198, 128, %s201, %s189
        $region32: #{tpu_custom_call.1} parent=27 // pred_fallthru
          _
      $region28: #{tpu_custom_call.1} parent=5 // pred_fallthru
        _
      %p204 = scmp.le.s32.totalorder 1, %s18
      %p205 = scmp.lt.s32.totalorder %s18, 3
      %p206 = pnand %p204, %p205
      %p207 = pneg %p206
      // Predicated region
      $region33: #{tpu_custom_call.1} parent=5 // pred_check
        _
      $region34: #{tpu_custom_call.1} parent=5 // pred_check_branch
        %209 = sbr.rel (%p206) target = $region36
      $region35: #{tpu_custom_call.1} parent=5 // pred_region
        %s210 = ssub.s32 %s18, 1
        %s211 = sand.u32 %s31, 1
        %s212 = scalar_lea.sflag [#allocation3], %s211
        %s213 = sand.u32 %s31, 1
        %s214 = smul.addr %s213, 8
        %s215 = scalar_lea.vmem [#allocation2], %s214
        // Predicated region
        $region37: #{tpu_custom_call.1} parent=35 // pred_check
          %p216 = pneg %p44
        $region38: #{tpu_custom_call.1} parent=35 // pred_check_branch
          %218 = sbr.rel (%p216) target = $region40
        $region39: #{tpu_custom_call.1} parent=35 // pred_region
          %219 = dma.done %s212, 128
        $region40: #{tpu_custom_call.1} parent=35 // pred_fallthru
          _
        // Predicated region
        $region41: #{tpu_custom_call.1} parent=35 // pred_check
          %p220 = pneg %p65
        $region42: #{tpu_custom_call.1} parent=35 // pred_check_branch
          %222 = sbr.rel (%p220) target = $region44
        $region43: #{tpu_custom_call.1} parent=35 // pred_region
          %223 = dma.done [#allocation6], 128
        $region44: #{tpu_custom_call.1} parent=35 // pred_fallthru
          _
        // Predicated region
        $region45: #{tpu_custom_call.1} parent=35 // pred_check
          %p224 = pneg %p86
        $region46: #{tpu_custom_call.1} parent=35 // pred_check_branch
          %226 = sbr.rel (%p224) target = $region48
        $region47: #{tpu_custom_call.1} parent=35 // pred_region
          %227 = dma.done [#allocation6], 128
        $region48: #{tpu_custom_call.1} parent=35 // pred_fallthru
          _
        // Predicated region
        $region49: #{tpu_custom_call.1} parent=35 // pred_check
          %p228 = pneg %p107
        $region50: #{tpu_custom_call.1} parent=35 // pred_check_branch
          %230 = sbr.rel (%p228) target = $region52
        $region51: #{tpu_custom_call.1} parent=35 // pred_region
          %231 = dma.done [#allocation9], 256
        $region52: #{tpu_custom_call.1} parent=35 // pred_fallthru
          _
        %s232 = sand.u32 %s31, 1
        %s233 = scalar_lea.sflag [#allocation3], %s232
        %s234 = sand.u32 %s31, 1
        %s235 = smul.addr %s234, 8
        %s236 = scalar_lea.vmem [#allocation2], %s235
        %p237 = pneg %p44
        %p238 = pneg %p41
        %p239 = pneg %p65
        %p240 = pneg %p62
        %p241 = pneg %p86
        %p242 = pneg %p83
        %p243 = pneg %p107
        %p244 = pneg %p104
        %p245 = pneg %p133
        %p246 = pneg %p130
        %s247 = sand.u32 %s120, 1
        %s248 = scalar_lea.sflag [#allocation4], %s247
        %s249 = sand.u32 %s120, 1
        %s250 = smul.addr %s249, 16
        %s251 = scalar_lea.vmem [#allocation10], %s250
        %v252 = vld [vmem:[#allocation5] sm:$0xff]
        %v253 = vld [vmem:[#allocation7] sm:$0xff]
        %v254 = vld [vmem:[#allocation8] sm:$0xff]
        %v255 = vld [vmem:[#allocation8 + $0x8] sm:$0xff]
        %v256 = vld [vmem:[%s215] sm:$0xff]
        %v258 = vcombine.high %v256, %v256
        %260 = vrot.lane.b32.xlu0 %v256, 17
        %v261 = vpop.permute.xlu0 %260
        %262 = vrot.lane.b32.xlu0 %v258, 17
        %v263 = vpop.permute.xlu0 %262
        %v264 = vlaneseq
        %v265 = vand.u32 %v264, 127
        %vm266 = vcmp.lt.s32.totalorder %v265, 17
        %v267 = vsel %vm266, %v261, %v263
        %v268 = vsel %vm266, %v263, %v261
        %v269 = vlaneseq
        %v270 = vshrl.u32 %v269, 7
        %v271 = vsub.s32 0, %v270
        %v272 = vrot.slane %v254, %v271
        %v273 = vlaneseq
        %v274 = vshrl.u32 %v273, 7
        %v275 = vsub.s32 0, %v274
        %v276 = vrot.slane %v255, %v275
        %v277 = vmul.f32 %v268, %v272
        %v278 = vmul.f32 %v267, %v276
        %279 = vrot.lane.b32.xlu0 %v256, 16
        %v280 = vpop.permute.xlu0 %279
        %281 = vrot.lane.b32.xlu0 %v258, 16
        %v282 = vpop.permute.xlu0 %281
        %vm283 = vcmp.lt.s32.totalorder %v265, 16
        %v284 = vsel %vm283, %v280, %v282
        %v285 = vsel %vm283, %v282, %v280
        %v286 = vlaneseq
        %v287 = vshrl.u32 %v286, 7
        %v288 = vsub.s32 1, %v287
        %v289 = vrot.slane %v254, %v288
        %v290 = vlaneseq
        %v291 = vshrl.u32 %v290, 7
        %v292 = vsub.s32 1, %v291
        %v293 = vrot.slane %v255, %v292
        %v294 = vmul.f32 %v285, %v289
        %v295 = vmul.f32 %v284, %v293
        %296 = vrot.lane.b32.xlu0 %v256, 15
        %v297 = vpop.permute.xlu0 %296
        %298 = vrot.lane.b32.xlu0 %v258, 15
        %v299 = vpop.permute.xlu0 %298
        %vm300 = vcmp.lt.s32.totalorder %v265, 15
        %v301 = vsel %vm300, %v297, %v299
        %v302 = vsel %vm300, %v299, %v297
        %v303 = vlaneseq
        %v304 = vshrl.u32 %v303, 7
        %v305 = vsub.s32 2, %v304
        %v306 = vrot.slane %v254, %v305
        %v307 = vlaneseq
        %v308 = vshrl.u32 %v307, 7
        %v309 = vsub.s32 2, %v308
        %v310 = vrot.slane %v255, %v309
        %v311 = vmul.f32 %v302, %v306
        %v312 = vmul.f32 %v301, %v310
        %313 = vrot.lane.b32.xlu0 %v256, 1
        %v314 = vpop.permute.xlu0 %313
        %315 = vrot.lane.b32.xlu0 %v258, 1
        %v316 = vpop.permute.xlu0 %315
        %vm317 = vcmp.lt.s32.totalorder %v265, 1
        %v318 = vsel %vm317, %v314, %v316
        %v319 = vsel %vm317, %v316, %v314
        %v320 = vlaneseq
        %v321 = vshrl.u32 %v320, 7
        %v322 = vsub.s32 3, %v321
        %v323 = vrot.slane %v254, %v322
        %v324 = vlaneseq
        %v325 = vshrl.u32 %v324, 7
        %v326 = vsub.s32 3, %v325
        %v327 = vrot.slane %v255, %v326
        %v328 = vmul.f32 %v319, %v323
        %v329 = vmul.f32 %v318, %v327
        %330 = vrot.lane.b32.xlu0 %v256, 127
        %v331 = vpop.permute.xlu0 %330
        %332 = vrot.lane.b32.xlu0 %v258, 127
        %v333 = vpop.permute.xlu0 %332
        %vm334 = vcmp.lt.s32.totalorder %v265, 127
        %v335 = vsel %vm334, %v331, %v333
        %v336 = vsel %vm334, %v333, %v331
        %v337 = vlaneseq
        %v338 = vshrl.u32 %v337, 7
        %v339 = vsub.s32 4, %v338
        %v340 = vrot.slane %v254, %v339
        %v341 = vlaneseq
        %v342 = vshrl.u32 %v341, 7
        %v343 = vsub.s32 4, %v342
        %v344 = vrot.slane %v255, %v343
        %v345 = vmul.f32 %v335, %v340
        %v346 = vmul.f32 %v336, %v344
        %347 = vrot.lane.b32.xlu0 %v256, 113
        %v348 = vpop.permute.xlu0 %347
        %349 = vrot.lane.b32.xlu0 %v258, 113
        %v350 = vpop.permute.xlu0 %349
        %vm351 = vcmp.lt.s32.totalorder %v265, 113
        %v352 = vsel %vm351, %v348, %v350
        %v353 = vsel %vm351, %v350, %v348
        %v354 = vlaneseq
        %v355 = vshrl.u32 %v354, 7
        %v356 = vsub.s32 5, %v355
        %v357 = vrot.slane %v254, %v356
        %v358 = vlaneseq
        %v359 = vshrl.u32 %v358, 7
        %v360 = vsub.s32 5, %v359
        %v361 = vrot.slane %v255, %v360
        %v362 = vmul.f32 %v352, %v357
        %v363 = vmul.f32 %v353, %v361
        %364 = vrot.lane.b32.xlu0 %v256, 112
        %v365 = vpop.permute.xlu0 %364
        %366 = vrot.lane.b32.xlu0 %v258, 112
        %v367 = vpop.permute.xlu0 %366
        %vm368 = vcmp.lt.s32.totalorder %v265, 112
        %v369 = vsel %vm368, %v365, %v367
        %v370 = vsel %vm368, %v367, %v365
        %v371 = vlaneseq
        %v372 = vshrl.u32 %v371, 7
        %v373 = vsub.s32 6, %v372
        %v374 = vrot.slane %v254, %v373
        %v375 = vlaneseq
        %v376 = vshrl.u32 %v375, 7
        %v377 = vsub.s32 6, %v376
        %v378 = vrot.slane %v255, %v377
        %v379 = vmul.f32 %v369, %v374
        %v380 = vmul.f32 %v370, %v378
        %381 = vrot.lane.b32.xlu0 %v256, 111
        %v382 = vpop.permute.xlu0 %381
        %383 = vrot.lane.b32.xlu0 %v258, 111
        %v384 = vpop.permute.xlu0 %383
        %vm385 = vcmp.lt.s32.totalorder %v265, 111
        %v386 = vsel %vm385, %v382, %v384
        %v387 = vsel %vm385, %v384, %v382
        %v388 = vlaneseq
        %v389 = vshrl.u32 %v388, 7
        %v390 = vsub.s32 7, %v389
        %v391 = vrot.slane %v254, %v390
        %v392 = vlaneseq
        %v393 = vshrl.u32 %v392, 7
        %v394 = vsub.s32 7, %v393
        %v395 = vrot.slane %v255, %v394
        %v396 = vmul.f32 %v386, %v391
        %v397 = vmul.f32 %v387, %v395
        %v400 = vrot.slane %v294, 4
        %v401 = vrot.slane %v295, 4
        %v406 = vrot.slane %v328, 4
        %v407 = vrot.slane %v329, 4
        %v412 = vrot.slane %v345, 4
        %v413 = vrot.slane %v346, 4
        %v418 = vrot.slane %v379, 4
        %v419 = vrot.slane %v380, 4
        %vm422 = vcmask 1043456
        %v423 = vsel %vm422, %v277, %v400
        %v424 = vsel %vm422, %v278, %v401
        %v425 = vsel %vm422, %v311, %v406
        %v426 = vsel %vm422, %v312, %v407
        %v427 = vsel %vm422, %v256, %v412
        %v428 = vsel %vm422, %v258, %v413
        %v429 = vsel %vm422, %v362, %v418
        %v430 = vsel %vm422, %v363, %v419
        %vm431 = vcmask 293888
        %v433 = vsel %vm431, %v252, 0
        %v436 = vsel %vm422, %v396, 0
        %v439 = vsel %vm422, %v397, 0
        %441 = vmatprep.subr.mxu0 0.0
        %442 = vmatpush1.msra.mxu0 0.0
        %443 = vmatprep.subr.mxu0 0.0
        %444 = vmatpush1.msra.mxu0 0.0
        %445 = vmatprep.subr.mxu0 0.0
        %446 = vmatpush1.msra.mxu0 0.0
        %447 = vmatprep.subr.mxu0 0.0
        %448 = vmatpush1.msra.mxu0 0.0
        %449 = vmatprep.subr.mxu0 0.0
        %450 = vmatpush1.msra.mxu0 0.0
        %451 = vmatprep.subr.mxu0 0.0
        %452 = vmatpush1.msra.mxu0 0.0
        %453 = vmatprep.subr.mxu0 0.0
        %454 = vmatpush1.msra.mxu0 0.0
        %455 = vmatprep.subr.mxu0 0.0
        %456 = vmatpush1.msra.mxu0 0.0
        %457 = vmatprep.subr.mxu0 0.0
        %458 = vmatpush1.msra.mxu0 0.0
        %459 = vmatprep.subr.mxu0 0.0
        %460 = vmatpush1.msra.mxu0 0.0
        %461 = vmatprep.subr.mxu0 0.0
        %462 = vmatpush1.msra.mxu0 0.0
        %463 = vmatprep.subr.mxu0 %v439
        %464 = vmatpush1.msra.mxu0 %v436
        %465 = vmatprep.subr.mxu0 %v430
        %466 = vmatpush1.msra.mxu0 %v429
        %467 = vmatprep.subr.mxu0 %v428
        %468 = vmatpush1.msra.mxu0 %v427
        %469 = vmatprep.subr.mxu0 %v426
        %470 = vmatpush1.msra.mxu0 %v425
        %471 = vmatprep.subr.mxu0 %v424
        %472 = vmatpush1.msra.mxu0 %v423
        %473 = vmatprep.subr.mxu0 0.0
        %474 = vmatpush2.msra.mxu0 0.0
        %475 = vmatprep.subr.mxu0 0.0
        %476 = vmatpush2.msra.mxu0 0.0
        %477 = vmatprep.subr.mxu0 0.0
        %478 = vmatpush2.msra.mxu0 0.0
        %479 = vmatprep.subr.mxu0 0.0
        %480 = vmatpush2.msra.mxu0 0.0
        %481 = vmatprep.subr.mxu0 0.0
        %482 = vmatpush2.msra.mxu0 0.0
        %483 = vmatprep.subr.mxu0 0.0
        %484 = vmatpush2.msra.mxu0 0.0
        %485 = vmatprep.subr.mxu0 0.0
        %486 = vmatpush2.msra.mxu0 0.0
        %487 = vmatprep.subr.mxu0 0.0
        %488 = vmatpush2.msra.mxu0 0.0
        %489 = vmatprep.subr.mxu0 0.0
        %490 = vmatpush2.msra.mxu0 0.0
        %491 = vmatprep.subr.mxu0 0.0
        %492 = vmatpush2.msra.mxu0 0.0
        %493 = vmatprep.subr.mxu0 0.0
        %494 = vmatpush2.msra.mxu0 0.0
        %495 = vmatprep.subr.mxu0 0.0
        %496 = vmatpush2.msra.mxu0 0.0
        %497 = vmatprep.subr.mxu0 0.0
        %498 = vmatpush2.msra.mxu0 0.0
        %499 = vmatprep.subr.mxu0 0.0
        %500 = vmatpush2.msra.mxu0 0.0
        %501 = vmatprep.subr.mxu0 0.0
        %502 = vmatpush2.msra.mxu0 0.0
        %503 = vmatprep.subr.mxu0 0.0
        %504 = vmatpush2.msra.mxu0 0.0
        %505 = vmatprep.mubr.f32.mxu0 0.0
        %506 = vmatmul.mubr.f32.gmra.mxu0 %v433
        %v507 = vpop.f32.mrf.mxu0
        %v508 = vadd.f32 0.0, %v507
        %v509 = vpop.f32.mrf.mxu0
        %v510 = vadd.f32 0.0, %v509
        %511 = vdwg.mxu0
        %v512 = vadd.f32 %v508, %v510
        %513 = vadd.xlane.f32.xlu0 %v512
        %v514 = vpop.xlane.xlu0 %513
        %v515 = vmul.f32 %v514, 0.00390625
        %v516 = vsub.f32 %v508, %v515
        %v517 = vsub.f32 %v510, %v515
        %v518 = vmul.f32 %v516, %v516
        %v519 = vmul.f32 %v517, %v517
        %v520 = vadd.f32 %v518, %v519
        %521 = vadd.xlane.f32.xlu0 %v520
        %v522 = vpop.xlane.xlu0 %521
        %v523 = vmul.f32 %v522, 0.00390625
        %v524 = vadd.f32 %v523, 1e-05
        %v525 = vrsqrt.pop %v524
        %v526 = vmul.f32 %v516, %v525
        %v527 = vmul.f32 %v517, %v525
        %v528 = vmax.f32 %v526, 0.0
        %v529 = vmax.f32 %v527, 0.0
        %530 = vrot.lane.b32.xlu0 %v528, 17
        %v531 = vpop.permute.xlu0 %530
        %532 = vrot.lane.b32.xlu0 %v529, 17
        %v533 = vpop.permute.xlu0 %532
        %v534 = vsel %vm266, %v531, %v533
        %v535 = vsel %vm266, %v533, %v531
        %v536 = vmul.f32 %v535, %v272
        %v537 = vmul.f32 %v534, %v276
        %538 = vrot.lane.b32.xlu0 %v528, 16
        %v539 = vpop.permute.xlu0 %538
        %540 = vrot.lane.b32.xlu0 %v529, 16
        %v541 = vpop.permute.xlu0 %540
        %v542 = vsel %vm283, %v539, %v541
        %v543 = vsel %vm283, %v541, %v539
        %v544 = vmul.f32 %v543, %v289
        %v545 = vmul.f32 %v542, %v293
        %546 = vrot.lane.b32.xlu0 %v528, 15
        %v547 = vpop.permute.xlu0 %546
        %548 = vrot.lane.b32.xlu0 %v529, 15
        %v549 = vpop.permute.xlu0 %548
        %v550 = vsel %vm300, %v547, %v549
        %v551 = vsel %vm300, %v549, %v547
        %v552 = vmul.f32 %v551, %v306
        %v553 = vmul.f32 %v550, %v310
        %554 = vrot.lane.b32.xlu0 %v528, 1
        %v555 = vpop.permute.xlu0 %554
        %556 = vrot.lane.b32.xlu0 %v529, 1
        %v557 = vpop.permute.xlu0 %556
        %v558 = vsel %vm317, %v555, %v557
        %v559 = vsel %vm317, %v557, %v555
        %v560 = vmul.f32 %v559, %v323
        %v561 = vmul.f32 %v558, %v327
        %562 = vrot.lane.b32.xlu0 %v528, 127
        %v563 = vpop.permute.xlu0 %562
        %564 = vrot.lane.b32.xlu0 %v529, 127
        %v565 = vpop.permute.xlu0 %564
        %v566 = vsel %vm334, %v563, %v565
        %v567 = vsel %vm334, %v565, %v563
        %v568 = vmul.f32 %v566, %v340
        %v569 = vmul.f32 %v567, %v344
        %570 = vrot.lane.b32.xlu0 %v528, 113
        %v571 = vpop.permute.xlu0 %570
        %572 = vrot.lane.b32.xlu0 %v529, 113
        %v573 = vpop.permute.xlu0 %572
        %v574 = vsel %vm351, %v571, %v573
        %v575 = vsel %vm351, %v573, %v571
        %v576 = vmul.f32 %v574, %v357
        %v577 = vmul.f32 %v575, %v361
        %578 = vrot.lane.b32.xlu0 %v528, 112
        %v579 = vpop.permute.xlu0 %578
        %580 = vrot.lane.b32.xlu0 %v529, 112
        %v581 = vpop.permute.xlu0 %580
        %v582 = vsel %vm368, %v579, %v581
        %v583 = vsel %vm368, %v581, %v579
        %v584 = vmul.f32 %v582, %v374
        %v585 = vmul.f32 %v583, %v378
        %586 = vrot.lane.b32.xlu0 %v528, 111
        %v587 = vpop.permute.xlu0 %586
        %588 = vrot.lane.b32.xlu0 %v529, 111
        %v589 = vpop.permute.xlu0 %588
        %v590 = vsel %vm385, %v587, %v589
        %v591 = vsel %vm385, %v589, %v587
        %v592 = vmul.f32 %v590, %v391
        %v593 = vmul.f32 %v591, %v395
        %vm594 = vcmask 588800
        %v596 = vsel %vm594, %v253, 0
        %598 = vmatprep.subr.mxu0 0.0
        %599 = vmatpush1.msra.mxu0 0.0
        %600 = vmatprep.subr.mxu0 0.0
        %601 = vmatpush1.msra.mxu0 0.0
        %602 = vmatprep.subr.mxu0 0.0
        %603 = vmatpush1.msra.mxu0 0.0
        %604 = vmatprep.subr.mxu0 0.0
        %605 = vmatpush1.msra.mxu0 0.0
        %606 = vmatprep.subr.mxu0 0.0
        %607 = vmatpush1.msra.mxu0 0.0
        %608 = vmatprep.subr.mxu0 0.0
        %609 = vmatpush1.msra.mxu0 0.0
        %610 = vmatprep.subr.mxu0 0.0
        %611 = vmatpush1.msra.mxu0 0.0
        %612 = vmatprep.subr.mxu0 %v593
        %613 = vmatpush1.msra.mxu0 %v592
        %614 = vmatprep.subr.mxu0 %v585
        %615 = vmatpush1.msra.mxu0 %v584
        %616 = vmatprep.subr.mxu0 %v577
        %617 = vmatpush1.msra.mxu0 %v576
        %618 = vmatprep.subr.mxu0 %v569
        %619 = vmatpush1.msra.mxu0 %v568
        %620 = vmatprep.subr.mxu0 %v529
        %621 = vmatpush1.msra.mxu0 %v528
        %622 = vmatprep.subr.mxu0 %v561
        %623 = vmatpush1.msra.mxu0 %v560
        %624 = vmatprep.subr.mxu0 %v553
        %625 = vmatpush1.msra.mxu0 %v552
        %626 = vmatprep.subr.mxu0 %v545
        %627 = vmatpush1.msra.mxu0 %v544
        %628 = vmatprep.subr.mxu0 %v537
        %629 = vmatpush1.msra.mxu0 %v536
        %630 = vmatprep.subr.mxu0 0.0
        %631 = vmatpush2.msra.mxu0 0.0
        %632 = vmatprep.subr.mxu0 0.0
        %633 = vmatpush2.msra.mxu0 0.0
        %634 = vmatprep.subr.mxu0 0.0
        %635 = vmatpush2.msra.mxu0 0.0
        %636 = vmatprep.subr.mxu0 0.0
        %637 = vmatpush2.msra.mxu0 0.0
        %638 = vmatprep.subr.mxu0 0.0
        %639 = vmatpush2.msra.mxu0 0.0
        %640 = vmatprep.subr.mxu0 0.0
        %641 = vmatpush2.msra.mxu0 0.0
        %642 = vmatprep.subr.mxu0 0.0
        %643 = vmatpush2.msra.mxu0 0.0
        %644 = vmatprep.subr.mxu0 0.0
        %645 = vmatpush2.msra.mxu0 0.0
        %646 = vmatprep.subr.mxu0 0.0
        %647 = vmatpush2.msra.mxu0 0.0
        %648 = vmatprep.subr.mxu0 0.0
        %649 = vmatpush2.msra.mxu0 0.0
        %650 = vmatprep.subr.mxu0 0.0
        %651 = vmatpush2.msra.mxu0 0.0
        %652 = vmatprep.subr.mxu0 0.0
        %653 = vmatpush2.msra.mxu0 0.0
        %654 = vmatprep.subr.mxu0 0.0
        %655 = vmatpush2.msra.mxu0 0.0
        %656 = vmatprep.subr.mxu0 0.0
        %657 = vmatpush2.msra.mxu0 0.0
        %658 = vmatprep.subr.mxu0 0.0
        %659 = vmatpush2.msra.mxu0 0.0
        %660 = vmatprep.subr.mxu0 0.0
        %661 = vmatpush2.msra.mxu0 0.0
        %662 = vmatprep.mubr.f32.mxu0 0.0
        %663 = vmatmul.mubr.f32.gmra.mxu0 %v596
        %v664 = vpop.f32.mrf.mxu0
        %v665 = vadd.f32 0.0, %v664
        %v666 = vpop.f32.mrf.mxu0
        %v667 = vadd.f32 0.0, %v666
        %668 = vdwg.mxu0
        %v669 = vadd.f32 %v665, %v667
        %670 = vadd.xlane.f32.xlu0 %v669
        %v671 = vpop.xlane.xlu0 %670
        %v672 = vmul.f32 %v671, 0.00390625
        %v673 = vsub.f32 %v665, %v672
        %v674 = vsub.f32 %v667, %v672
        %v675 = vmul.f32 %v673, %v673
        %v676 = vmul.f32 %v674, %v674
        %v677 = vadd.f32 %v675, %v676
        %678 = vadd.xlane.f32.xlu0 %v677
        %v679 = vpop.xlane.xlu0 %678
        %v680 = vmul.f32 %v679, 0.00390625
        %v681 = vadd.f32 %v680, 1e-05
        %v682 = vrsqrt.pop %v681
        %v683 = vmul.f32 %v673, %v682
        %v684 = vmul.f32 %v674, %v682
        %v685 = vmax.f32 %v683, 0.0
        %v686 = vmax.f32 %v684, 0.0
        %687 = vst [vmem:[%s251] sm:$0xff] %v685
        %688 = vst [vmem:[%s251 + $0x8] sm:$0xff] %v686
        %s689 = sand.u32 %s120, 1
        %s690 = scalar_lea.sflag [#allocation4], %s689
        %s691 = sand.u32 %s120, 1
        %s692 = smul.addr %s691, 16
        %s693 = scalar_lea.vmem [#allocation10], %s692
        // Predicated region
        $region53: #{tpu_custom_call.1} parent=35 // pred_check
          %p694 = pneg %p130
        $region54: #{tpu_custom_call.1} parent=35 // pred_check_branch
          %696 = sbr.rel (%p694) target = $region56
        $region55: #{tpu_custom_call.1} parent=35 // pred_region
          %s698 = ssub.s32 256, 256
          %699 = vsyncadd %s690, %s698
          %s700 = smul.addr %s23, 2
          %s701 = smul.addr %s700, 128
          %s702 = scalar_lea.hbm %s4, %s701
          %s704 = sshll.u32 %s693, 4
          %s705 = int_to_ptr.vmem [resolvable:$true] %s704
          %707 = dma.vmem_to_hbm [thread:$0]  %s705, 256, %s702, %s690
        $region56: #{tpu_custom_call.1} parent=35 // pred_fallthru
          _
      $region36: #{tpu_custom_call.1} parent=5 // pred_fallthru
        _
      %p708 = scmp.le.s32.totalorder 2, %s18
      // Predicated region
      $region57: #{tpu_custom_call.1} parent=5 // pred_check
        %p709 = pneg %p708
      $region58: #{tpu_custom_call.1} parent=5 // pred_check_branch
        %711 = sbr.rel (%p709) target = $region60
      $region59: #{tpu_custom_call.1} parent=5 // pred_region
        %s712 = ssub.s32 %s18, 2
        // Predicated region
        $region61: #{tpu_custom_call.1} parent=59 // pred_check
          %p713 = pneg %p136
        $region62: #{tpu_custom_call.1} parent=59 // pred_check_branch
          %715 = sbr.rel (%p713) target = $region64
        $region63: #{tpu_custom_call.1} parent=59 // pred_region
          %s716 = sand.u32 %s121, 1
          %s717 = scalar_lea.sflag [#allocation4], %s716
          %s718 = sand.u32 %s121, 1
          %s719 = smul.addr %s718, 16
          %s720 = scalar_lea.vmem [#allocation10], %s719
          %721 = dma.done %s717, 256
        $region64: #{tpu_custom_call.1} parent=59 // pred_fallthru
          _
      $region60: #{tpu_custom_call.1} parent=5 // pred_fallthru
        _
    $region6: #{tpu_custom_call.1} parent=1 // loop_footer
      %s22 = sadd.s32 1, %s18
    $region7: #{tpu_custom_call.1} parent=1 // loop_footer_branch
      %17 = sbr.rel target = $region3
    $region8: #{tpu_custom_call.1} parent=1 // loop_exit
      _
    %722 = vsyncpa [#allocation3], 1
    %s723 = scalar_lea.sflag [#allocation3], 1
    %724 = vsyncpa %s723, 1
    %725 = vsyncpa [#allocation6], 1
    %726 = vsyncpa [#allocation9], 1
    %727 = vsyncpa [#allocation4], 1
    %s728 = scalar_lea.sflag [#allocation4], 1
    %729 = vsyncpa %s728, 1

</llo_original>
